<compile_context>
chip_gen: v7x
topology: tpu7x:2x2x1
jax: 0.10.0
libtpu: 0.0.40
codegen_flags: <defaults>
</compile_context>

<pallas_src>
import numpy as np
import jax
import jax.numpy as jnp
from jax import lax
from jax.experimental import pallas as pl
from jax.experimental.pallas import tpu as pltpu


# ----------------------------------------------------------------------------
# The module's fixed filters (used for the pure-JAX reference; the kernel bakes
# in their separable +/-1 structure directly and never reads weights).
# ----------------------------------------------------------------------------
_filter_vals = np.array(
    [[-1, -1, 1, 1],
     [-1, -1, 1, 1],
     [-1, -1, 1, 1],
     [-1, -1, 1, 1]], dtype=np.float32)
_filter_1 = _filter_vals
_filter_2 = -_filter_1
_filter_3 = _filter_1.T
_filter_4 = -_filter_3
FILTERS = np.stack([_filter_1, _filter_2, _filter_3, _filter_4])   # (4, 4, 4)
WEIGHT = FILTERS[:, None, :, :].astype(np.float32)                 # (4, 1, 4, 4)  OIHW

_KH = 4
_KW = 4
_C_OUT = 4

# Per-grid-step VMEM budget (bytes): conservative across v5e/v6e (128 MiB
# physical) and v7x (64 MiB physical, 32 MiB default scoped), already counting
# the double-buffered Pallas pipeline in the tile chooser below.
_VMEM_BUDGET_BYTES = 16 * 1024 * 1024
_VMEM_LIMIT_BYTES = 32 * 1024 * 1024
# Vreg-pressure cap on the batch (lane) tile: each phase keeps roughly one
# (H, Wo, B) intermediate plus one (Ho, Wo, B) result live; far beyond ~512
# lanes those spill through VMEM and compete with the output stores.
_MAX_LANES_PER_STEP = 512


# ----------------------------------------------------------------------------
# Pallas kernel: one batch tile per grid step, all 4 output channels.
#   x_ref:    (H, W, B_TILE)            VMEM   (batch on the lane axis)
#   conv_ref: (4, Ho, Wo, B_TILE)       VMEM
#   relu_ref: (4, Ho, Wo, B_TILE)       VMEM
#
# Filter structure exploited (all entries +/-1, ch1 = -ch0, ch3 = -ch2):
#   ch0 = (4-row box sum along H) o ([-1,-1,+1,+1] pass along W)
#   ch2 = (4-col box sum along W) o ([-1,-1,+1,+1] pass along H)
# The two 1-D passes commute, so both channels are built from the same four
# column-shifted views of x; the sublane-shifted work happens once per phase
# directly on x_ref and every H-direction pass is a free leading-axis offset.
# No multiplies, no MXU, no weight loads.
# ----------------------------------------------------------------------------
def conv_relu_kernel(x_ref, conv_ref, relu_ref):
    ho = conv_ref.shape[1]
    wo = conv_ref.shape[2]

    # ---- Phase A: channels 0 / 1 -------------------------------------------
    # Horizontal [-1,-1,+1,+1] pass straight off x_ref, then free row box sum.
    d = (x_ref[:, pl.ds(2, wo), :] + x_ref[:, pl.ds(3, wo), :]) - (
        x_ref[:, pl.ds(0, wo), :] + x_ref[:, pl.ds(1, wo), :])          # (H, Wo, B)
    c0 = (d[0:ho] + d[1:ho + 1]) + (d[2:ho + 2] + d[3:ho + 3])          # (Ho, Wo, B)
    conv_ref[0, :, :, :] = c0
    relu_ref[0, :, :, :] = jnp.maximum(c0, 0.0)
    c1 = -c0
    conv_ref[1, :, :, :] = c1
    relu_ref[1, :, :, :] = jnp.maximum(c1, 0.0)

    # ---- Phase B: channels 2 / 3 -------------------------------------------
    # Horizontal 4-col box sum (re-indexing x_ref: loads are cheap filler, the
    # store path is what binds), then the free leading-axis +/- pass.
    s = (x_ref[:, pl.ds(0, wo), :] + x_ref[:, pl.ds(1, wo), :]) + (
        x_ref[:, pl.ds(2, wo), :] + x_ref[:, pl.ds(3, wo), :])          # (H, Wo, B)
    c2 = (s[2:ho + 2] + s[3:ho + 3]) - (s[0:ho] + s[1:ho + 1])          # (Ho, Wo, B)
    conv_ref[2, :, :, :] = c2
    relu_ref[2, :, :, :] = jnp.maximum(c2, 0.0)
    c3 = -c2
    conv_ref[3, :, :, :] = c3
    relu_ref[3, :, :, :] = jnp.maximum(c3, 0.0)


# ----------------------------------------------------------------------------
# Batch-tile selection from a VMEM budget (not a bare n//128 heuristic).
# ----------------------------------------------------------------------------
def _choose_batch_tile(n, h, w, ho, wo):
    # f32 bytes per batch lane per pipeline buffer: input + conv + relu blocks.
    bytes_per_lane = 4 * (h * w + 2 * _C_OUT * ho * wo)
    # Pallas double-buffers every input/output block.
    max_lanes = max(int(_VMEM_BUDGET_BYTES // (2 * bytes_per_lane)), 1)
    max_lanes = min(max_lanes, _MAX_LANES_PER_STEP)

    if n <= max_lanes and n < 256:
        return n                       # single exact-fit step: no padded lanes

    tile = max((max_lanes // 128) * 128, 128)
    if n >= 256:
        # Megacore (v7x): keep >=2 grid steps so the "parallel" batch axis can
        # be sharded across both TensorCores.
        half = (((n + 1) // 2) + 127) // 128 * 128
        tile = min(tile, half)
    tile = min(tile, ((n + 127) // 128) * 128)
    # Prefer a tile that divides n evenly so the last step is not mostly masked.
    for cand in range(tile, 0, -128):
        if n % cand == 0:
            return cand
    return tile


# ----------------------------------------------------------------------------
# Wrapper: semantics of Net.forward -> (conv_x, relu(conv_x)).
#   out_layout="NCHW": PyTorch-identical layout (adds two output transposes).
#   out_layout="CHWN": kernel-native (4, Ho, Wo, N), skips both transposes
#                      (use when the consumer can accept that layout).
# ----------------------------------------------------------------------------
def net_forward(x_nchw, *, out_layout="NCHW", prefer_xla_for_small_batch=False):
    n, c_in, h, w = x_nchw.shape
    assert c_in == 1, "module is Conv2d(1, 4, ...)"
    ho, wo = h - _KH + 1, w - _KW + 1

    if prefer_xla_for_small_batch and n < 128:
        # With batch on the lane axis, tiny N leaves lanes (1 - n/128) empty;
        # the plain XLA conv is the better dispatch for such shapes.
        conv = lax.conv_general_dilated(
            x_nchw.astype(jnp.float32), jnp.asarray(WEIGHT),
            window_strides=(1, 1), padding="VALID",
            dimension_numbers=("NCHW", "OIHW", "NCHW"))
        relu = jnp.maximum(conv, 0.0)
        if out_layout == "CHWN":
            return (jnp.transpose(conv, (1, 2, 3, 0)),
                    jnp.transpose(relu, (1, 2, 3, 0)))
        return conv, relu

    # Batch on the lane axis: (N, 1, H, W) -> (H, W, N).  Layout plumbing only.
    x_hwb = jnp.transpose(x_nchw[:, 0].astype(jnp.float32), (1, 2, 0))

    b_tile = _choose_batch_tile(n, h, w, ho, wo)
    grid = (pl.cdiv(n, b_tile),)

    # TODO(synk): for large spatial inputs whose block footprint exceeds the VMEM
    # budget even at 128 lanes, add an H-tiling grid axis with a 3-row halo; not
    # needed for this module's small 16x16 use case.

    flops = int(14 * ho * wo * n)                              # adds/subs only
    bytes_accessed = int(4 * (h * w + 2 * _C_OUT * ho * wo) * n)

    conv_chwn, relu_chwn = pl.pallas_call(
        conv_relu_kernel,
        out_shape=(
            jax.ShapeDtypeStruct((_C_OUT, ho, wo, n), jnp.float32),
            jax.ShapeDtypeStruct((_C_OUT, ho, wo, n), jnp.float32),
        ),
        grid=grid,
        in_specs=[
            pl.BlockSpec((h, w, b_tile), lambda b: (0, 0, b)),
        ],
        out_specs=(
            pl.BlockSpec((_C_OUT, ho, wo, b_tile), lambda b: (0, 0, 0, b)),
            pl.BlockSpec((_C_OUT, ho, wo, b_tile), lambda b: (0, 0, 0, b)),
        ),
        compiler_params=pltpu.CompilerParams(
            dimension_semantics=("parallel",),     # shard batch tiles across TCs (v7x)
            vmem_limit_bytes=_VMEM_LIMIT_BYTES,
        ),
        cost_estimate=pl.CostEstimate(
            flops=flops, transcendentals=0, bytes_accessed=bytes_accessed),
    )(x_hwb)

    if out_layout == "CHWN":
        return conv_chwn, relu_chwn

    # PyTorch-identical NCHW (extra HBM pass over both outputs; see out_layout).
    conv_x = jnp.transpose(conv_chwn, (3, 0, 1, 2))
    activated_x = jnp.transpose(relu_chwn, (3, 0, 1, 2))
    return conv_x, activated_x


# ----------------------------------------------------------------------------
# Pure-JAX reference for verification (uses the actual fixed weights).
# ----------------------------------------------------------------------------
def net_forward_ref(x_nchw):
    conv = lax.conv_general_dilated(
        x_nchw.astype(jnp.float32),
        jnp.asarray(WEIGHT),
        window_strides=(1, 1),
        padding="VALID",
        dimension_numbers=("NCHW", "OIHW", "NCHW"),
    )
    return conv, jnp.maximum(conv, 0.0)


if __name__ == "__main__":
    key = jax.random.PRNGKey(0)
    # NCHW, single input channel — consistent with the module.
    x = jax.random.normal(key, (2, 1, 16, 16), dtype=jnp.float32)

    conv_ref, act_ref = net_forward_ref(x)

    # Default PyTorch-identical NCHW path.
    conv_x, activated_x = net_forward(x)
    conv_x = jax.block_until_ready(conv_x)
    activated_x = jax.block_until_ready(activated_x)
    np.testing.assert_allclose(np.asarray(conv_x), np.asarray(conv_ref),
                               rtol=1e-5, atol=1e-5)
    np.testing.assert_allclose(np.asarray(activated_x), np.asarray(act_ref),
                               rtol=1e-5, atol=1e-5)

    # Kernel-native CHWN path (no output transposes).
    conv_n, act_n = net_forward(x, out_layout="CHWN")
    conv_n = jax.block_until_ready(conv_n)
    act_n = jax.block_until_ready(act_n)
    np.testing.assert_allclose(np.asarray(conv_n),
                               np.transpose(np.asarray(conv_ref), (1, 2, 3, 0)),
                               rtol=1e-5, atol=1e-5)
    np.testing.assert_allclose(np.asarray(act_n),
                               np.transpose(np.asarray(act_ref), (1, 2, 3, 0)),
                               rtol=1e-5, atol=1e-5)

    print("KERNEL_OK")
</pallas_src>

<mosaic_0001>
module attributes {stable_mosaic.version = 11 : i64} {
  func.func @conv_relu_kernel(%arg0: i32, %arg1: memref<16x16x2xf32, #tpu.memory_space<vmem>>, %arg2: memref<4x13x13x2xf32, #tpu.memory_space<vmem>>, %arg3: memref<4x13x13x2xf32, #tpu.memory_space<vmem>>) attributes {dimension_semantics = [#tpu.dimension_semantics<parallel>], iteration_bounds = array<i64: 1>, scalar_prefetch = 0 : i64, scratch_operands = 0 : i64, tpu.core_type = #tpu.core_type<tc>, window_params = [{transform_indices = @transform_0, window_bounds = array<i64: 16, 16, 2>}, {transform_indices = @transform_1, window_bounds = array<i64: 4, 13, 13, 2>}, {transform_indices = @transform_2, window_bounds = array<i64: 4, 13, 13, 2>}]} {
    %c0 = arith.constant 0 : index
    %c2 = arith.constant 2 : index
    %c0_0 = arith.constant 0 : index
    %0 = vector.load %arg1[%c0, %c2, %c0_0] : memref<16x16x2xf32, #tpu.memory_space<vmem>>, vector<16x13x2xf32>
    %c0_1 = arith.constant 0 : index
    %c3 = arith.constant 3 : index
    %c0_2 = arith.constant 0 : index
    %1 = vector.load %arg1[%c0_1, %c3, %c0_2] : memref<16x16x2xf32, #tpu.memory_space<vmem>>, vector<16x13x2xf32>
    %2 = arith.addf %0, %1 : vector<16x13x2xf32>
    %c0_3 = arith.constant 0 : index
    %c0_4 = arith.constant 0 : index
    %c0_5 = arith.constant 0 : index
    %3 = vector.load %arg1[%c0_3, %c0_4, %c0_5] : memref<16x16x2xf32, #tpu.memory_space<vmem>>, vector<16x13x2xf32>
    %c0_6 = arith.constant 0 : index
    %c1 = arith.constant 1 : index
    %c0_7 = arith.constant 0 : index
    %4 = vector.load %arg1[%c0_6, %c1, %c0_7] : memref<16x16x2xf32, #tpu.memory_space<vmem>>, vector<16x13x2xf32>
    %5 = arith.addf %3, %4 : vector<16x13x2xf32>
    %6 = arith.subf %2, %5 : vector<16x13x2xf32>
    %7 = vector.extract_strided_slice %6 {offsets = [0, 0, 0], sizes = [13, 13, 2], strides = [1, 1, 1]} : vector<16x13x2xf32> to vector<13x13x2xf32>
    %8 = vector.extract_strided_slice %6 {offsets = [1, 0, 0], sizes = [13, 13, 2], strides = [1, 1, 1]} : vector<16x13x2xf32> to vector<13x13x2xf32>
    %9 = arith.addf %7, %8 : vector<13x13x2xf32>
    %10 = vector.extract_strided_slice %6 {offsets = [2, 0, 0], sizes = [13, 13, 2], strides = [1, 1, 1]} : vector<16x13x2xf32> to vector<13x13x2xf32>
    %11 = vector.extract_strided_slice %6 {offsets = [3, 0, 0], sizes = [13, 13, 2], strides = [1, 1, 1]} : vector<16x13x2xf32> to vector<13x13x2xf32>
    %12 = arith.addf %10, %11 : vector<13x13x2xf32>
    %13 = arith.addf %9, %12 : vector<13x13x2xf32>
    %c0_8 = arith.constant 0 : index
    %c0_9 = arith.constant 0 : index
    %c0_10 = arith.constant 0 : index
    %c0_11 = arith.constant 0 : index
    %14 = vector.load %arg2[%c0_8, %c0_9, %c0_10, %c0_11] : memref<4x13x13x2xf32, #tpu.memory_space<vmem>>, vector<1x13x13x2xf32>
    %15 = vector.shape_cast %14 : vector<1x13x13x2xf32> to vector<13x13x2xf32>
    %16 = vector.shape_cast %13 : vector<13x13x2xf32> to vector<1x13x13x2xf32>
    tpu.vector_store %arg2[%c0_8, %c0_9, %c0_10, %c0_11], %16 {strides = array<i32>} : memref<4x13x13x2xf32, #tpu.memory_space<vmem>>, vector<1x13x13x2xf32>,
    %cst = arith.constant 0.000000e+00 : f32
    %17 = vector.broadcast %cst : f32 to vector<13x13x2xf32>
    %18 = arith.maximumf %13, %17 : vector<13x13x2xf32>
    %c0_12 = arith.constant 0 : index
    %c0_13 = arith.constant 0 : index
    %c0_14 = arith.constant 0 : index
    %c0_15 = arith.constant 0 : index
    %19 = vector.load %arg3[%c0_12, %c0_13, %c0_14, %c0_15] : memref<4x13x13x2xf32, #tpu.memory_space<vmem>>, vector<1x13x13x2xf32>
    %20 = vector.shape_cast %19 : vector<1x13x13x2xf32> to vector<13x13x2xf32>
    %21 = vector.shape_cast %18 : vector<13x13x2xf32> to vector<1x13x13x2xf32>
    tpu.vector_store %arg3[%c0_12, %c0_13, %c0_14, %c0_15], %21 {strides = array<i32>} : memref<4x13x13x2xf32, #tpu.memory_space<vmem>>, vector<1x13x13x2xf32>,
    %cst_16 = arith.constant 0.000000e+00 : f32
    %22 = vector.broadcast %cst_16 : f32 to vector<13x13x2xf32>
    %23 = arith.subf %22, %13 : vector<13x13x2xf32>
    %c1_17 = arith.constant 1 : index
    %c0_18 = arith.constant 0 : index
    %c0_19 = arith.constant 0 : index
    %c0_20 = arith.constant 0 : index
    %24 = vector.load %arg2[%c1_17, %c0_18, %c0_19, %c0_20] : memref<4x13x13x2xf32, #tpu.memory_space<vmem>>, vector<1x13x13x2xf32>
    %25 = vector.shape_cast %24 : vector<1x13x13x2xf32> to vector<13x13x2xf32>
    %26 = vector.shape_cast %23 : vector<13x13x2xf32> to vector<1x13x13x2xf32>
    tpu.vector_store %arg2[%c1_17, %c0_18, %c0_19, %c0_20], %26 {strides = array<i32>} : memref<4x13x13x2xf32, #tpu.memory_space<vmem>>, vector<1x13x13x2xf32>,
    %cst_21 = arith.constant 0.000000e+00 : f32
    %27 = vector.broadcast %cst_21 : f32 to vector<13x13x2xf32>
    %28 = arith.maximumf %23, %27 : vector<13x13x2xf32>
    %c1_22 = arith.constant 1 : index
    %c0_23 = arith.constant 0 : index
    %c0_24 = arith.constant 0 : index
    %c0_25 = arith.constant 0 : index
    %29 = vector.load %arg3[%c1_22, %c0_23, %c0_24, %c0_25] : memref<4x13x13x2xf32, #tpu.memory_space<vmem>>, vector<1x13x13x2xf32>
    %30 = vector.shape_cast %29 : vector<1x13x13x2xf32> to vector<13x13x2xf32>
    %31 = vector.shape_cast %28 : vector<13x13x2xf32> to vector<1x13x13x2xf32>
    tpu.vector_store %arg3[%c1_22, %c0_23, %c0_24, %c0_25], %31 {strides = array<i32>} : memref<4x13x13x2xf32, #tpu.memory_space<vmem>>, vector<1x13x13x2xf32>,
    %c0_26 = arith.constant 0 : index
    %c0_27 = arith.constant 0 : index
    %c0_28 = arith.constant 0 : index
    %32 = vector.load %arg1[%c0_26, %c0_27, %c0_28] : memref<16x16x2xf32, #tpu.memory_space<vmem>>, vector<16x13x2xf32>
    %c0_29 = arith.constant 0 : index
    %c1_30 = arith.constant 1 : index
    %c0_31 = arith.constant 0 : index
    %33 = vector.load %arg1[%c0_29, %c1_30, %c0_31] : memref<16x16x2xf32, #tpu.memory_space<vmem>>, vector<16x13x2xf32>
    %34 = arith.addf %32, %33 : vector<16x13x2xf32>
    %c0_32 = arith.constant 0 : index
    %c2_33 = arith.constant 2 : index
    %c0_34 = arith.constant 0 : index
    %35 = vector.load %arg1[%c0_32, %c2_33, %c0_34] : memref<16x16x2xf32, #tpu.memory_space<vmem>>, vector<16x13x2xf32>
    %c0_35 = arith.constant 0 : index
    %c3_36 = arith.constant 3 : index
    %c0_37 = arith.constant 0 : index
    %36 = vector.load %arg1[%c0_35, %c3_36, %c0_37] : memref<16x16x2xf32, #tpu.memory_space<vmem>>, vector<16x13x2xf32>
    %37 = arith.addf %35, %36 : vector<16x13x2xf32>
    %38 = arith.addf %34, %37 : vector<16x13x2xf32>
    %39 = vector.extract_strided_slice %38 {offsets = [2, 0, 0], sizes = [13, 13, 2], strides = [1, 1, 1]} : vector<16x13x2xf32> to vector<13x13x2xf32>
    %40 = vector.extract_strided_slice %38 {offsets = [3, 0, 0], sizes = [13, 13, 2], strides = [1, 1, 1]} : vector<16x13x2xf32> to vector<13x13x2xf32>
    %41 = arith.addf %39, %40 : vector<13x13x2xf32>
    %42 = vector.extract_strided_slice %38 {offsets = [0, 0, 0], sizes = [13, 13, 2], strides = [1, 1, 1]} : vector<16x13x2xf32> to vector<13x13x2xf32>
    %43 = vector.extract_strided_slice %38 {offsets = [1, 0, 0], sizes = [13, 13, 2], strides = [1, 1, 1]} : vector<16x13x2xf32> to vector<13x13x2xf32>
    %44 = arith.addf %42, %43 : vector<13x13x2xf32>
    %45 = arith.subf %41, %44 : vector<13x13x2xf32>
    %c2_38 = arith.constant 2 : index
    %c0_39 = arith.constant 0 : index
    %c0_40 = arith.constant 0 : index
    %c0_41 = arith.constant 0 : index
    %46 = vector.load %arg2[%c2_38, %c0_39, %c0_40, %c0_41] : memref<4x13x13x2xf32, #tpu.memory_space<vmem>>, vector<1x13x13x2xf32>
    %47 = vector.shape_cast %46 : vector<1x13x13x2xf32> to vector<13x13x2xf32>
    %48 = vector.shape_cast %45 : vector<13x13x2xf32> to vector<1x13x13x2xf32>
    tpu.vector_store %arg2[%c2_38, %c0_39, %c0_40, %c0_41], %48 {strides = array<i32>} : memref<4x13x13x2xf32, #tpu.memory_space<vmem>>, vector<1x13x13x2xf32>,
    %cst_42 = arith.constant 0.000000e+00 : f32
    %49 = vector.broadcast %cst_42 : f32 to vector<13x13x2xf32>
    %50 = arith.maximumf %45, %49 : vector<13x13x2xf32>
    %c2_43 = arith.constant 2 : index
    %c0_44 = arith.constant 0 : index
    %c0_45 = arith.constant 0 : index
    %c0_46 = arith.constant 0 : index
    %51 = vector.load %arg3[%c2_43, %c0_44, %c0_45, %c0_46] : memref<4x13x13x2xf32, #tpu.memory_space<vmem>>, vector<1x13x13x2xf32>
    %52 = vector.shape_cast %51 : vector<1x13x13x2xf32> to vector<13x13x2xf32>
    %53 = vector.shape_cast %50 : vector<13x13x2xf32> to vector<1x13x13x2xf32>
    tpu.vector_store %arg3[%c2_43, %c0_44, %c0_45, %c0_46], %53 {strides = array<i32>} : memref<4x13x13x2xf32, #tpu.memory_space<vmem>>, vector<1x13x13x2xf32>,
    %cst_47 = arith.constant 0.000000e+00 : f32
    %54 = vector.broadcast %cst_47 : f32 to vector<13x13x2xf32>
    %55 = arith.subf %54, %45 : vector<13x13x2xf32>
    %c3_48 = arith.constant 3 : index
    %c0_49 = arith.constant 0 : index
    %c0_50 = arith.constant 0 : index
    %c0_51 = arith.constant 0 : index
    %56 = vector.load %arg2[%c3_48, %c0_49, %c0_50, %c0_51] : memref<4x13x13x2xf32, #tpu.memory_space<vmem>>, vector<1x13x13x2xf32>
    %57 = vector.shape_cast %56 : vector<1x13x13x2xf32> to vector<13x13x2xf32>
    %58 = vector.shape_cast %55 : vector<13x13x2xf32> to vector<1x13x13x2xf32>
    tpu.vector_store %arg2[%c3_48, %c0_49, %c0_50, %c0_51], %58 {strides = array<i32>} : memref<4x13x13x2xf32, #tpu.memory_space<vmem>>, vector<1x13x13x2xf32>,
    %cst_52 = arith.constant 0.000000e+00 : f32
    %59 = vector.broadcast %cst_52 : f32 to vector<13x13x2xf32>
    %60 = arith.maximumf %55, %59 : vector<13x13x2xf32>
    %c3_53 = arith.constant 3 : index
    %c0_54 = arith.constant 0 : index
    %c0_55 = arith.constant 0 : index
    %c0_56 = arith.constant 0 : index
    %61 = vector.load %arg3[%c3_53, %c0_54, %c0_55, %c0_56] : memref<4x13x13x2xf32, #tpu.memory_space<vmem>>, vector<1x13x13x2xf32>
    %62 = vector.shape_cast %61 : vector<1x13x13x2xf32> to vector<13x13x2xf32>
    %63 = vector.shape_cast %60 : vector<13x13x2xf32> to vector<1x13x13x2xf32>
    tpu.vector_store %arg3[%c3_53, %c0_54, %c0_55, %c0_56], %63 {strides = array<i32>} : memref<4x13x13x2xf32, #tpu.memory_space<vmem>>, vector<1x13x13x2xf32>,
    return
  }
  func.func @transform_0(%arg0: i32) -> (i32, i32, i32) {
    %c0_i32 = arith.constant 0 : i32
    %c0_i32_0 = arith.constant 0 : i32
    %c0_i32_1 = arith.constant 0 : i32
    return %c0_i32, %c0_i32_0, %arg0 : i32, i32, i32
  }
  func.func @transform_1(%arg0: i32) -> (i32, i32, i32, i32) {
    %c0_i32 = arith.constant 0 : i32
    %c0_i32_0 = arith.constant 0 : i32
    %c0_i32_1 = arith.constant 0 : i32
    %c0_i32_2 = arith.constant 0 : i32
    return %c0_i32, %c0_i32_0, %c0_i32_1, %arg0 : i32, i32, i32, i32
  }
  func.func @transform_2(%arg0: i32) -> (i32, i32, i32, i32) {
    %c0_i32 = arith.constant 0 : i32
    %c0_i32_0 = arith.constant 0 : i32
    %c0_i32_1 = arith.constant 0 : i32
    %c0_i32_2 = arith.constant 0 : i32
    return %c0_i32, %c0_i32_0, %c0_i32_1, %arg0 : i32, i32, i32, i32
  }
}

</mosaic_0001>

<llo_original>
// kernel: tpu_custom_call.1
$region0: #{tpu_custom_call.1}
  #allocation0 [shape = 'u32[]', space=smem, size = 0x4, offset = 0x4, fixed_abs, tag = 'smem constant byte address 0x4 - core index']
  #allocation1 [shape = 'u32[144,128]{1,0:T(1,128)}', space=vmem, size = 0x12000, scoped, tag = 'internal scratch']
  %s0 = inlined_call_operand.vmem [shape: f32[16,16,2], index: 0, kind: input, shape index: {}]
  %s1 = inlined_call_operand.vmem [shape: f32[4,13,13,2], index: 1, kind: output, shape index: {0}]
  %s2 = inlined_call_operand.vmem [shape: f32[4,13,13,2], index: 2, kind: output, shape index: {1}]
  %3 = xla_tuple %s1, %s2
  %s4 = sld [smem:[#allocation0]]
  $region22: #{tpu_custom_call.1} parent=0
    _
  %s6 = ssub.s32 1, %s4
  %s7 = scalar_select 0, %s6, %s4
  // Predicated region
  $region2: #{tpu_custom_call.1} parent=0 // pred_check
    _
  $region3: #{tpu_custom_call.1} parent=0 // pred_check_branch
    %9 = sbr.rel (0) target = $region5
  $region4: #{tpu_custom_call.1} parent=0 // pred_region
    _
  $region5: #{tpu_custom_call.1} parent=0 // pred_fallthru
    _
  %v10 = vld [vmem:[%s0 + $0x2] sm:$0xff]
  %v11 = vld [vmem:[%s0 + $0xa] sm:$0x1f]
  %v12 = vld [vmem:[%s0 + $0x12] sm:$0xff]
  %v13 = vld [vmem:[%s0 + $0x1a] sm:$0x1f]
  %v14 = vld [vmem:[%s0 + $0x22] sm:$0xff]
  %v15 = vld [vmem:[%s0 + $0x2a] sm:$0x1f]
  %v16 = vld [vmem:[%s0 + $0x32] sm:$0xff]
  %v17 = vld [vmem:[%s0 + $0x3a] sm:$0x1f]
  %v18 = vld [vmem:[%s0 + $0x42] sm:$0xff]
  %v19 = vld [vmem:[%s0 + $0x4a] sm:$0x1f]
  %v20 = vld [vmem:[%s0 + $0x52] sm:$0xff]
  %v21 = vld [vmem:[%s0 + $0x5a] sm:$0x1f]
  %v22 = vld [vmem:[%s0 + $0x62] sm:$0xff]
  %v23 = vld [vmem:[%s0 + $0x6a] sm:$0x1f]
  %v24 = vld [vmem:[%s0 + $0x72] sm:$0xff]
  %v25 = vld [vmem:[%s0 + $0x7a] sm:$0x1f]
  %v26 = vld [vmem:[%s0 + $0x82] sm:$0xff]
  %v27 = vld [vmem:[%s0 + $0x8a] sm:$0x1f]
  %v28 = vld [vmem:[%s0 + $0x92] sm:$0xff]
  %v29 = vld [vmem:[%s0 + $0x9a] sm:$0x1f]
  %v30 = vld [vmem:[%s0 + $0xa2] sm:$0xff]
  %v31 = vld [vmem:[%s0 + $0xaa] sm:$0x1f]
  %v32 = vld [vmem:[%s0 + $0xb2] sm:$0xff]
  %v33 = vld [vmem:[%s0 + $0xba] sm:$0x1f]
  %v34 = vld [vmem:[%s0 + $0xc2] sm:$0xff]
  %v35 = vld [vmem:[%s0 + $0xca] sm:$0x1f]
  %v36 = vld [vmem:[%s0 + $0xd2] sm:$0xff]
  %v37 = vld [vmem:[%s0 + $0xda] sm:$0x1f]
  %v38 = vld [vmem:[%s0 + $0xe2] sm:$0xff]
  %v39 = vld [vmem:[%s0 + $0xea] sm:$0x1f]
  %v40 = vld [vmem:[%s0 + $0xf2] sm:$0xff]
  %v41 = vld [vmem:[%s0 + $0xfa] sm:$0x1f]
  %v42 = vld [vmem:[%s0 + $0x3] sm:$0xff]
  %v43 = vld [vmem:[%s0 + $0xb] sm:$0x1f]
  %v44 = vld [vmem:[%s0 + $0x13] sm:$0xff]
  %v45 = vld [vmem:[%s0 + $0x1b] sm:$0x1f]
  %v46 = vld [vmem:[%s0 + $0x23] sm:$0xff]
  %v47 = vld [vmem:[%s0 + $0x2b] sm:$0x1f]
  %v48 = vld [vmem:[%s0 + $0x33] sm:$0xff]
  %v49 = vld [vmem:[%s0 + $0x3b] sm:$0x1f]
  %v50 = vld [vmem:[%s0 + $0x43] sm:$0xff]
  %v51 = vld [vmem:[%s0 + $0x4b] sm:$0x1f]
  %v52 = vld [vmem:[%s0 + $0x53] sm:$0xff]
  %v53 = vld [vmem:[%s0 + $0x5b] sm:$0x1f]
  %v54 = vld [vmem:[%s0 + $0x63] sm:$0xff]
  %v55 = vld [vmem:[%s0 + $0x6b] sm:$0x1f]
  %v56 = vld [vmem:[%s0 + $0x73] sm:$0xff]
  %v57 = vld [vmem:[%s0 + $0x7b] sm:$0x1f]
  %v58 = vld [vmem:[%s0 + $0x83] sm:$0xff]
  %v59 = vld [vmem:[%s0 + $0x8b] sm:$0x1f]
  %v60 = vld [vmem:[%s0 + $0x93] sm:$0xff]
  %v61 = vld [vmem:[%s0 + $0x9b] sm:$0x1f]
  %v62 = vld [vmem:[%s0 + $0xa3] sm:$0xff]
  %v63 = vld [vmem:[%s0 + $0xab] sm:$0x1f]
  %v64 = vld [vmem:[%s0 + $0xb3] sm:$0xff]
  %v65 = vld [vmem:[%s0 + $0xbb] sm:$0x1f]
  %v66 = vld [vmem:[%s0 + $0xc3] sm:$0xff]
  %v67 = vld [vmem:[%s0 + $0xcb] sm:$0x1f]
  %v68 = vld [vmem:[%s0 + $0xd3] sm:$0xff]
  %v69 = vld [vmem:[%s0 + $0xdb] sm:$0x1f]
  %v70 = vld [vmem:[%s0 + $0xe3] sm:$0xff]
  %v71 = vld [vmem:[%s0 + $0xeb] sm:$0x1f]
  %v72 = vld [vmem:[%s0 + $0xf3] sm:$0xff]
  %v73 = vld [vmem:[%s0 + $0xfb] sm:$0x1f]
  %v74 = vadd.f32 %v10, %v42
  %v75 = vadd.f32 %v11, %v43
  %v76 = vadd.f32 %v12, %v44
  %v77 = vadd.f32 %v13, %v45
  %v78 = vadd.f32 %v14, %v46
  %v79 = vadd.f32 %v15, %v47
  %v80 = vadd.f32 %v16, %v48
  %v81 = vadd.f32 %v17, %v49
  %v82 = vadd.f32 %v18, %v50
  %v83 = vadd.f32 %v19, %v51
  %v84 = vadd.f32 %v20, %v52
  %v85 = vadd.f32 %v21, %v53
  %v86 = vadd.f32 %v22, %v54
  %v87 = vadd.f32 %v23, %v55
  %v88 = vadd.f32 %v24, %v56
  %v89 = vadd.f32 %v25, %v57
  %v90 = vadd.f32 %v26, %v58
  %v91 = vadd.f32 %v27, %v59
  %v92 = vadd.f32 %v28, %v60
  %v93 = vadd.f32 %v29, %v61
  %v94 = vadd.f32 %v30, %v62
  %v95 = vadd.f32 %v31, %v63
  %v96 = vadd.f32 %v32, %v64
  %v97 = vadd.f32 %v33, %v65
  %v98 = vadd.f32 %v34, %v66
  %v99 = vadd.f32 %v35, %v67
  %v100 = vadd.f32 %v36, %v68
  %v101 = vadd.f32 %v37, %v69
  %v102 = vadd.f32 %v38, %v70
  %v103 = vadd.f32 %v39, %v71
  %v104 = vadd.f32 %v40, %v72
  %v105 = vadd.f32 %v41, %v73
  %v106 = vld [vmem:[%s0] sm:$0xff]
  %v107 = vld [vmem:[%s0 + $0x8] sm:$0x1f]
  %v108 = vld [vmem:[%s0 + $0x10] sm:$0xff]
  %v109 = vld [vmem:[%s0 + $0x18] sm:$0x1f]
  %v110 = vld [vmem:[%s0 + $0x20] sm:$0xff]
  %v111 = vld [vmem:[%s0 + $0x28] sm:$0x1f]
  %v112 = vld [vmem:[%s0 + $0x30] sm:$0xff]
  %v113 = vld [vmem:[%s0 + $0x38] sm:$0x1f]
  %v114 = vld [vmem:[%s0 + $0x40] sm:$0xff]
  %v115 = vld [vmem:[%s0 + $0x48] sm:$0x1f]
  %v116 = vld [vmem:[%s0 + $0x50] sm:$0xff]
  %v117 = vld [vmem:[%s0 + $0x58] sm:$0x1f]
  %v118 = vld [vmem:[%s0 + $0x60] sm:$0xff]
  %v119 = vld [vmem:[%s0 + $0x68] sm:$0x1f]
  %v120 = vld [vmem:[%s0 + $0x70] sm:$0xff]
  %v121 = vld [vmem:[%s0 + $0x78] sm:$0x1f]
  %v122 = vld [vmem:[%s0 + $0x80] sm:$0xff]
  %v123 = vld [vmem:[%s0 + $0x88] sm:$0x1f]
  %v124 = vld [vmem:[%s0 + $0x90] sm:$0xff]
  %v125 = vld [vmem:[%s0 + $0x98] sm:$0x1f]
  %v126 = vld [vmem:[%s0 + $0xa0] sm:$0xff]
  %v127 = vld [vmem:[%s0 + $0xa8] sm:$0x1f]
  %v128 = vld [vmem:[%s0 + $0xb0] sm:$0xff]
  %v129 = vld [vmem:[%s0 + $0xb8] sm:$0x1f]
  %v130 = vld [vmem:[%s0 + $0xc0] sm:$0xff]
  %v131 = vld [vmem:[%s0 + $0xc8] sm:$0x1f]
  %v132 = vld [vmem:[%s0 + $0xd0] sm:$0xff]
  %v133 = vld [vmem:[%s0 + $0xd8] sm:$0x1f]
  %v134 = vld [vmem:[%s0 + $0xe0] sm:$0xff]
  %v135 = vld [vmem:[%s0 + $0xe8] sm:$0x1f]
  %v136 = vld [vmem:[%s0 + $0xf0] sm:$0xff]
  %v137 = vld [vmem:[%s0 + $0xf8] sm:$0x1f]
  %v138 = vld [vmem:[%s0 + $0x1] sm:$0xff]
  %v139 = vld [vmem:[%s0 + $0x9] sm:$0x1f]
  %v140 = vld [vmem:[%s0 + $0x11] sm:$0xff]
  %v141 = vld [vmem:[%s0 + $0x19] sm:$0x1f]
  %v142 = vld [vmem:[%s0 + $0x21] sm:$0xff]
  %v143 = vld [vmem:[%s0 + $0x29] sm:$0x1f]
  %v144 = vld [vmem:[%s0 + $0x31] sm:$0xff]
  %v145 = vld [vmem:[%s0 + $0x39] sm:$0x1f]
  %v146 = vld [vmem:[%s0 + $0x41] sm:$0xff]
  %v147 = vld [vmem:[%s0 + $0x49] sm:$0x1f]
  %v148 = vld [vmem:[%s0 + $0x51] sm:$0xff]
  %v149 = vld [vmem:[%s0 + $0x59] sm:$0x1f]
  %v150 = vld [vmem:[%s0 + $0x61] sm:$0xff]
  %v151 = vld [vmem:[%s0 + $0x69] sm:$0x1f]
  %v152 = vld [vmem:[%s0 + $0x71] sm:$0xff]
  %v153 = vld [vmem:[%s0 + $0x79] sm:$0x1f]
  %v154 = vld [vmem:[%s0 + $0x81] sm:$0xff]
  %v155 = vld [vmem:[%s0 + $0x89] sm:$0x1f]
  %v156 = vld [vmem:[%s0 + $0x91] sm:$0xff]
  %v157 = vld [vmem:[%s0 + $0x99] sm:$0x1f]
  %v158 = vld [vmem:[%s0 + $0xa1] sm:$0xff]
  %v159 = vld [vmem:[%s0 + $0xa9] sm:$0x1f]
  %v160 = vld [vmem:[%s0 + $0xb1] sm:$0xff]
  %v161 = vld [vmem:[%s0 + $0xb9] sm:$0x1f]
  %v162 = vld [vmem:[%s0 + $0xc1] sm:$0xff]
  %v163 = vld [vmem:[%s0 + $0xc9] sm:$0x1f]
  %v164 = vld [vmem:[%s0 + $0xd1] sm:$0xff]
  %v165 = vld [vmem:[%s0 + $0xd9] sm:$0x1f]
  %v166 = vld [vmem:[%s0 + $0xe1] sm:$0xff]
  %v167 = vld [vmem:[%s0 + $0xe9] sm:$0x1f]
  %v168 = vld [vmem:[%s0 + $0xf1] sm:$0xff]
  %v169 = vld [vmem:[%s0 + $0xf9] sm:$0x1f]
  %v170 = vadd.f32 %v106, %v138
  %v171 = vadd.f32 %v107, %v139
  %v172 = vadd.f32 %v108, %v140
  %v173 = vadd.f32 %v109, %v141
  %v174 = vadd.f32 %v110, %v142
  %v175 = vadd.f32 %v111, %v143
  %v176 = vadd.f32 %v112, %v144
  %v177 = vadd.f32 %v113, %v145
  %v178 = vadd.f32 %v114, %v146
  %v179 = vadd.f32 %v115, %v147
  %v180 = vadd.f32 %v116, %v148
  %v181 = vadd.f32 %v117, %v149
  %v182 = vadd.f32 %v118, %v150
  %v183 = vadd.f32 %v119, %v151
  %v184 = vadd.f32 %v120, %v152
  %v185 = vadd.f32 %v121, %v153
  %v186 = vadd.f32 %v122, %v154
  %v187 = vadd.f32 %v123, %v155
  %v188 = vadd.f32 %v124, %v156
  %v189 = vadd.f32 %v125, %v157
  %v190 = vadd.f32 %v126, %v158
  %v191 = vadd.f32 %v127, %v159
  %v192 = vadd.f32 %v128, %v160
  %v193 = vadd.f32 %v129, %v161
  %v194 = vadd.f32 %v130, %v162
  %v195 = vadd.f32 %v131, %v163
  %v196 = vadd.f32 %v132, %v164
  %v197 = vadd.f32 %v133, %v165
  %v198 = vadd.f32 %v134, %v166
  %v199 = vadd.f32 %v135, %v167
  %v200 = vadd.f32 %v136, %v168
  %v201 = vadd.f32 %v137, %v169
  %v202 = vsub.f32 %v74, %v170
  %v203 = vsub.f32 %v75, %v171
  %v204 = vsub.f32 %v76, %v172
  %v205 = vsub.f32 %v77, %v173
  %v206 = vsub.f32 %v78, %v174
  %v207 = vsub.f32 %v79, %v175
  %v208 = vsub.f32 %v80, %v176
  %v209 = vsub.f32 %v81, %v177
  %v210 = vsub.f32 %v82, %v178
  %v211 = vsub.f32 %v83, %v179
  %v212 = vsub.f32 %v84, %v180
  %v213 = vsub.f32 %v85, %v181
  %v214 = vsub.f32 %v86, %v182
  %v215 = vsub.f32 %v87, %v183
  %v216 = vsub.f32 %v88, %v184
  %v217 = vsub.f32 %v89, %v185
  %v218 = vsub.f32 %v90, %v186
  %v219 = vsub.f32 %v91, %v187
  %v220 = vsub.f32 %v92, %v188
  %v221 = vsub.f32 %v93, %v189
  %v222 = vsub.f32 %v94, %v190
  %v223 = vsub.f32 %v95, %v191
  %v224 = vsub.f32 %v96, %v192
  %v225 = vsub.f32 %v97, %v193
  %v226 = vsub.f32 %v98, %v194
  %v227 = vsub.f32 %v99, %v195
  %v228 = vsub.f32 %v100, %v196
  %v229 = vsub.f32 %v101, %v197
  %v230 = vsub.f32 %v102, %v198
  %v231 = vsub.f32 %v103, %v199
  %v232 = vsub.f32 %v104, %v200
  %v233 = vsub.f32 %v105, %v201
  %v234 = vadd.f32 %v202, %v204
  %v235 = vadd.f32 %v203, %v205
  %v236 = vadd.f32 %v204, %v206
  %v237 = vadd.f32 %v205, %v207
  %v238 = vadd.f32 %v206, %v208
  %v239 = vadd.f32 %v207, %v209
  %v240 = vadd.f32 %v208, %v210
  %v241 = vadd.f32 %v209, %v211
  %v242 = vadd.f32 %v210, %v212
  %v243 = vadd.f32 %v211, %v213
  %v244 = vadd.f32 %v212, %v214
  %v245 = vadd.f32 %v213, %v215
  %v246 = vadd.f32 %v214, %v216
  %v247 = vadd.f32 %v215, %v217
  %v248 = vadd.f32 %v216, %v218
  %v249 = vadd.f32 %v217, %v219
  %v250 = vadd.f32 %v218, %v220
  %v251 = vadd.f32 %v219, %v221
  %v252 = vadd.f32 %v220, %v222
  %v253 = vadd.f32 %v221, %v223
  %v254 = vadd.f32 %v222, %v224
  %v255 = vadd.f32 %v223, %v225
  %v256 = vadd.f32 %v224, %v226
  %v257 = vadd.f32 %v225, %v227
  %v258 = vadd.f32 %v226, %v228
  %v259 = vadd.f32 %v227, %v229
  %v260 = vadd.f32 %v228, %v230
  %v261 = vadd.f32 %v229, %v231
  %v262 = vadd.f32 %v230, %v232
  %v263 = vadd.f32 %v231, %v233
  %v264 = vadd.f32 %v234, %v238
  %v265 = vadd.f32 %v235, %v239
  %v266 = vadd.f32 %v236, %v240
  %v267 = vadd.f32 %v237, %v241
  %v268 = vadd.f32 %v238, %v242
  %v269 = vadd.f32 %v239, %v243
  %v270 = vadd.f32 %v240, %v244
  %v271 = vadd.f32 %v241, %v245
  %v272 = vadd.f32 %v242, %v246
  %v273 = vadd.f32 %v243, %v247
  %v274 = vadd.f32 %v244, %v248
  %v275 = vadd.f32 %v245, %v249
  %v276 = vadd.f32 %v246, %v250
  %v277 = vadd.f32 %v247, %v251
  %v278 = vadd.f32 %v248, %v252
  %v279 = vadd.f32 %v249, %v253
  %v280 = vadd.f32 %v250, %v254
  %v281 = vadd.f32 %v251, %v255
  %v282 = vadd.f32 %v252, %v256
  %v283 = vadd.f32 %v253, %v257
  %v284 = vadd.f32 %v254, %v258
  %v285 = vadd.f32 %v255, %v259
  %v286 = vadd.f32 %v256, %v260
  %v287 = vadd.f32 %v257, %v261
  %v288 = vadd.f32 %v258, %v262
  %v289 = vadd.f32 %v259, %v263
  %vm290 = vcmask 15360
  %291 = vst.msk [vmem:[%s1] sm:$0xff] %vm290, %v264
  %vm292 = vcmask 12288
  %293 = vst.msk [vmem:[%s1 + $0x8] sm:$0x1f] %vm292, %v265
  %294 = vst.msk [vmem:[%s1 + $0x10] sm:$0xff] %vm290, %v266
  %295 = vst.msk [vmem:[%s1 + $0x18] sm:$0x1f] %vm292, %v267
  %296 = vst.msk [vmem:[%s1 + $0x20] sm:$0xff] %vm290, %v268
  %297 = vst.msk [vmem:[%s1 + $0x28] sm:$0x1f] %vm292, %v269
  %298 = vst.msk [vmem:[%s1 + $0x30] sm:$0xff] %vm290, %v270
  %299 = vst.msk [vmem:[%s1 + $0x38] sm:$0x1f] %vm292, %v271
  %300 = vst.msk [vmem:[%s1 + $0x40] sm:$0xff] %vm290, %v272
  %301 = vst.msk [vmem:[%s1 + $0x48] sm:$0x1f] %vm292, %v273
  %302 = vst.msk [vmem:[%s1 + $0x50] sm:$0xff] %vm290, %v274
  %303 = vst.msk [vmem:[%s1 + $0x58] sm:$0x1f] %vm292, %v275
  %304 = vst.msk [vmem:[%s1 + $0x60] sm:$0xff] %vm290, %v276
  %305 = vst.msk [vmem:[%s1 + $0x68] sm:$0x1f] %vm292, %v277
  %306 = vst.msk [vmem:[%s1 + $0x70] sm:$0xff] %vm290, %v278
  %307 = vst.msk [vmem:[%s1 + $0x78] sm:$0x1f] %vm292, %v279
  %308 = vst.msk [vmem:[%s1 + $0x80] sm:$0xff] %vm290, %v280
  %309 = vst.msk [vmem:[%s1 + $0x88] sm:$0x1f] %vm292, %v281
  %310 = vst.msk [vmem:[%s1 + $0x90] sm:$0xff] %vm290, %v282
  %311 = vst.msk [vmem:[%s1 + $0x98] sm:$0x1f] %vm292, %v283
  %312 = vst.msk [vmem:[%s1 + $0xa0] sm:$0xff] %vm290, %v284
  %313 = vst.msk [vmem:[%s1 + $0xa8] sm:$0x1f] %vm292, %v285
  %314 = vst.msk [vmem:[%s1 + $0xb0] sm:$0xff] %vm290, %v286
  %315 = vst.msk [vmem:[%s1 + $0xb8] sm:$0x1f] %vm292, %v287
  %316 = vst.msk [vmem:[%s1 + $0xc0] sm:$0xff] %vm290, %v288
  %317 = vst.msk [vmem:[%s1 + $0xc8] sm:$0x1f] %vm292, %v289
  %v318 = vmax.f32 %v264, 0.0
  %v319 = vmax.f32 %v265, 0.0
  %v320 = vmax.f32 %v266, 0.0
  %v321 = vmax.f32 %v267, 0.0
  %v322 = vmax.f32 %v268, 0.0
  %v323 = vmax.f32 %v269, 0.0
  %v324 = vmax.f32 %v270, 0.0
  %v325 = vmax.f32 %v271, 0.0
  %v326 = vmax.f32 %v272, 0.0
  %v327 = vmax.f32 %v273, 0.0
  %v328 = vmax.f32 %v274, 0.0
  %v329 = vmax.f32 %v275, 0.0
  %v330 = vmax.f32 %v276, 0.0
  %v331 = vmax.f32 %v277, 0.0
  %v332 = vmax.f32 %v278, 0.0
  %v333 = vmax.f32 %v279, 0.0
  %v334 = vmax.f32 %v280, 0.0
  %v335 = vmax.f32 %v281, 0.0
  %v336 = vmax.f32 %v282, 0.0
  %v337 = vmax.f32 %v283, 0.0
  %v338 = vmax.f32 %v284, 0.0
  %v339 = vmax.f32 %v285, 0.0
  %v340 = vmax.f32 %v286, 0.0
  %v341 = vmax.f32 %v287, 0.0
  %v342 = vmax.f32 %v288, 0.0
  %v343 = vmax.f32 %v289, 0.0
  %344 = vst.msk [vmem:[%s2] sm:$0xff] %vm290, %v318
  %345 = vst.msk [vmem:[%s2 + $0x8] sm:$0x1f] %vm292, %v319
  %346 = vst.msk [vmem:[%s2 + $0x10] sm:$0xff] %vm290, %v320
  %347 = vst.msk [vmem:[%s2 + $0x18] sm:$0x1f] %vm292, %v321
  %348 = vst.msk [vmem:[%s2 + $0x20] sm:$0xff] %vm290, %v322
  %349 = vst.msk [vmem:[%s2 + $0x28] sm:$0x1f] %vm292, %v323
  %350 = vst.msk [vmem:[%s2 + $0x30] sm:$0xff] %vm290, %v324
  %351 = vst.msk [vmem:[%s2 + $0x38] sm:$0x1f] %vm292, %v325
  %352 = vst.msk [vmem:[%s2 + $0x40] sm:$0xff] %vm290, %v326
  %353 = vst.msk [vmem:[%s2 + $0x48] sm:$0x1f] %vm292, %v327
  %354 = vst.msk [vmem:[%s2 + $0x50] sm:$0xff] %vm290, %v328
  %355 = vst.msk [vmem:[%s2 + $0x58] sm:$0x1f] %vm292, %v329
  %356 = vst.msk [vmem:[%s2 + $0x60] sm:$0xff] %vm290, %v330
  %357 = vst.msk [vmem:[%s2 + $0x68] sm:$0x1f] %vm292, %v331
  %358 = vst.msk [vmem:[%s2 + $0x70] sm:$0xff] %vm290, %v332
  %359 = vst.msk [vmem:[%s2 + $0x78] sm:$0x1f] %vm292, %v333
  %360 = vst.msk [vmem:[%s2 + $0x80] sm:$0xff] %vm290, %v334
  %361 = vst.msk [vmem:[%s2 + $0x88] sm:$0x1f] %vm292, %v335
  %362 = vst.msk [vmem:[%s2 + $0x90] sm:$0xff] %vm290, %v336
  %363 = vst.msk [vmem:[%s2 + $0x98] sm:$0x1f] %vm292, %v337
  %364 = vst.msk [vmem:[%s2 + $0xa0] sm:$0xff] %vm290, %v338
  %365 = vst.msk [vmem:[%s2 + $0xa8] sm:$0x1f] %vm292, %v339
  %366 = vst.msk [vmem:[%s2 + $0xb0] sm:$0xff] %vm290, %v340
  %367 = vst.msk [vmem:[%s2 + $0xb8] sm:$0x1f] %vm292, %v341
  %368 = vst.msk [vmem:[%s2 + $0xc0] sm:$0xff] %vm290, %v342
  %369 = vst.msk [vmem:[%s2 + $0xc8] sm:$0x1f] %vm292, %v343
  %v370 = vsub.f32 0.0, %v264
  %v371 = vsub.f32 0.0, %v265
  %v372 = vsub.f32 0.0, %v266
  %v373 = vsub.f32 0.0, %v267
  %v374 = vsub.f32 0.0, %v268
  %v375 = vsub.f32 0.0, %v269
  %v376 = vsub.f32 0.0, %v270
  %v377 = vsub.f32 0.0, %v271
  %v378 = vsub.f32 0.0, %v272
  %v379 = vsub.f32 0.0, %v273
  %v380 = vsub.f32 0.0, %v274
  %v381 = vsub.f32 0.0, %v275
  %v382 = vsub.f32 0.0, %v276
  %v383 = vsub.f32 0.0, %v277
  %v384 = vsub.f32 0.0, %v278
  %v385 = vsub.f32 0.0, %v279
  %v386 = vsub.f32 0.0, %v280
  %v387 = vsub.f32 0.0, %v281
  %v388 = vsub.f32 0.0, %v282
  %v389 = vsub.f32 0.0, %v283
  %v390 = vsub.f32 0.0, %v284
  %v391 = vsub.f32 0.0, %v285
  %v392 = vsub.f32 0.0, %v286
  %v393 = vsub.f32 0.0, %v287
  %v394 = vsub.f32 0.0, %v288
  %v395 = vsub.f32 0.0, %v289
  %s396 = scalar_lea.vmem %s1, 208
  %397 = vst.msk [vmem:[%s396] sm:$0xff] %vm290, %v370
  %398 = vst.msk [vmem:[%s396 + $0x8] sm:$0x1f] %vm292, %v371
  %399 = vst.msk [vmem:[%s396 + $0x10] sm:$0xff] %vm290, %v372
  %400 = vst.msk [vmem:[%s396 + $0x18] sm:$0x1f] %vm292, %v373
  %401 = vst.msk [vmem:[%s396 + $0x20] sm:$0xff] %vm290, %v374
  %402 = vst.msk [vmem:[%s396 + $0x28] sm:$0x1f] %vm292, %v375
  %403 = vst.msk [vmem:[%s396 + $0x30] sm:$0xff] %vm290, %v376
  %404 = vst.msk [vmem:[%s396 + $0x38] sm:$0x1f] %vm292, %v377
  %405 = vst.msk [vmem:[%s396 + $0x40] sm:$0xff] %vm290, %v378
  %406 = vst.msk [vmem:[%s396 + $0x48] sm:$0x1f] %vm292, %v379
  %407 = vst.msk [vmem:[%s396 + $0x50] sm:$0xff] %vm290, %v380
  %408 = vst.msk [vmem:[%s396 + $0x58] sm:$0x1f] %vm292, %v381
  %409 = vst.msk [vmem:[%s396 + $0x60] sm:$0xff] %vm290, %v382
  %410 = vst.msk [vmem:[%s396 + $0x68] sm:$0x1f] %vm292, %v383
  %411 = vst.msk [vmem:[%s396 + $0x70] sm:$0xff] %vm290, %v384
  %412 = vst.msk [vmem:[%s396 + $0x78] sm:$0x1f] %vm292, %v385
  %413 = vst.msk [vmem:[%s396 + $0x80] sm:$0xff] %vm290, %v386
  %414 = vst.msk [vmem:[%s396 + $0x88] sm:$0x1f] %vm292, %v387
  %415 = vst.msk [vmem:[%s396 + $0x90] sm:$0xff] %vm290, %v388
  %416 = vst.msk [vmem:[%s396 + $0x98] sm:$0x1f] %vm292, %v389
  %417 = vst.msk [vmem:[%s396 + $0xa0] sm:$0xff] %vm290, %v390
  %418 = vst.msk [vmem:[%s396 + $0xa8] sm:$0x1f] %vm292, %v391
  %419 = vst.msk [vmem:[%s396 + $0xb0] sm:$0xff] %vm290, %v392
  %420 = vst.msk [vmem:[%s396 + $0xb8] sm:$0x1f] %vm292, %v393
  %421 = vst.msk [vmem:[%s396 + $0xc0] sm:$0xff] %vm290, %v394
  %422 = vst.msk [vmem:[%s396 + $0xc8] sm:$0x1f] %vm292, %v395
  %v423 = vmax.f32 %v370, 0.0
  %v424 = vmax.f32 %v371, 0.0
  %v425 = vmax.f32 %v372, 0.0
  %v426 = vmax.f32 %v373, 0.0
  %v427 = vmax.f32 %v374, 0.0
  %v428 = vmax.f32 %v375, 0.0
  %v429 = vmax.f32 %v376, 0.0
  %v430 = vmax.f32 %v377, 0.0
  %v431 = vmax.f32 %v378, 0.0
  %v432 = vmax.f32 %v379, 0.0
  %v433 = vmax.f32 %v380, 0.0
  %v434 = vmax.f32 %v381, 0.0
  %v435 = vmax.f32 %v382, 0.0
  %v436 = vmax.f32 %v383, 0.0
  %v437 = vmax.f32 %v384, 0.0
  %v438 = vmax.f32 %v385, 0.0
  %v439 = vmax.f32 %v386, 0.0
  %v440 = vmax.f32 %v387, 0.0
  %v441 = vmax.f32 %v388, 0.0
  %v442 = vmax.f32 %v389, 0.0
  %v443 = vmax.f32 %v390, 0.0
  %v444 = vmax.f32 %v391, 0.0
  %v445 = vmax.f32 %v392, 0.0
  %v446 = vmax.f32 %v393, 0.0
  %v447 = vmax.f32 %v394, 0.0
  %v448 = vmax.f32 %v395, 0.0
  %s449 = scalar_lea.vmem %s2, 208
  %450 = vst.msk [vmem:[%s449] sm:$0xff] %vm290, %v423
  %451 = vst.msk [vmem:[%s449 + $0x8] sm:$0x1f] %vm292, %v424
  %452 = vst.msk [vmem:[%s449 + $0x10] sm:$0xff] %vm290, %v425
  %453 = vst.msk [vmem:[%s449 + $0x18] sm:$0x1f] %vm292, %v426
  %454 = vst.msk [vmem:[%s449 + $0x20] sm:$0xff] %vm290, %v427
  %455 = vst.msk [vmem:[%s449 + $0x28] sm:$0x1f] %vm292, %v428
  %456 = vst.msk [vmem:[%s449 + $0x30] sm:$0xff] %vm290, %v429
  %457 = vst.msk [vmem:[%s449 + $0x38] sm:$0x1f] %vm292, %v430
  %458 = vst.msk [vmem:[%s449 + $0x40] sm:$0xff] %vm290, %v431
  %459 = vst.msk [vmem:[%s449 + $0x48] sm:$0x1f] %vm292, %v432
  %460 = vst.msk [vmem:[%s449 + $0x50] sm:$0xff] %vm290, %v433
  %461 = vst.msk [vmem:[%s449 + $0x58] sm:$0x1f] %vm292, %v434
  %462 = vst.msk [vmem:[%s449 + $0x60] sm:$0xff] %vm290, %v435
  %463 = vst.msk [vmem:[%s449 + $0x68] sm:$0x1f] %vm292, %v436
  %464 = vst.msk [vmem:[%s449 + $0x70] sm:$0xff] %vm290, %v437
  %465 = vst.msk [vmem:[%s449 + $0x78] sm:$0x1f] %vm292, %v438
  %466 = vst.msk [vmem:[%s449 + $0x80] sm:$0xff] %vm290, %v439
  %467 = vst.msk [vmem:[%s449 + $0x88] sm:$0x1f] %vm292, %v440
  %468 = vst.msk [vmem:[%s449 + $0x90] sm:$0xff] %vm290, %v441
  %469 = vst.msk [vmem:[%s449 + $0x98] sm:$0x1f] %vm292, %v442
  %470 = vst.msk [vmem:[%s449 + $0xa0] sm:$0xff] %vm290, %v443
  %471 = vst.msk [vmem:[%s449 + $0xa8] sm:$0x1f] %vm292, %v444
  %472 = vst.msk [vmem:[%s449 + $0xb0] sm:$0xff] %vm290, %v445
  %473 = vst.msk [vmem:[%s449 + $0xb8] sm:$0x1f] %vm292, %v446
  %474 = vst.msk [vmem:[%s449 + $0xc0] sm:$0xff] %vm290, %v447
  %475 = vst.msk [vmem:[%s449 + $0xc8] sm:$0x1f] %vm292, %v448
  %v476 = vld [vmem:[%s0] sm:$0xff]
  %v477 = vld [vmem:[%s0 + $0x8] sm:$0x1f]
  %v478 = vld [vmem:[%s0 + $0x10] sm:$0xff]
  %v479 = vld [vmem:[%s0 + $0x18] sm:$0x1f]
  %v480 = vld [vmem:[%s0 + $0x20] sm:$0xff]
  %v481 = vld [vmem:[%s0 + $0x28] sm:$0x1f]
  %v482 = vld [vmem:[%s0 + $0x30] sm:$0xff]
  %v483 = vld [vmem:[%s0 + $0x38] sm:$0x1f]
  %v484 = vld [vmem:[%s0 + $0x40] sm:$0xff]
  %v485 = vld [vmem:[%s0 + $0x48] sm:$0x1f]
  %v486 = vld [vmem:[%s0 + $0x50] sm:$0xff]
  %v487 = vld [vmem:[%s0 + $0x58] sm:$0x1f]
  %v488 = vld [vmem:[%s0 + $0x60] sm:$0xff]
  %v489 = vld [vmem:[%s0 + $0x68] sm:$0x1f]
  %v490 = vld [vmem:[%s0 + $0x70] sm:$0xff]
  %v491 = vld [vmem:[%s0 + $0x78] sm:$0x1f]
  %v492 = vld [vmem:[%s0 + $0x80] sm:$0xff]
  %v493 = vld [vmem:[%s0 + $0x88] sm:$0x1f]
  %v494 = vld [vmem:[%s0 + $0x90] sm:$0xff]
  %v495 = vld [vmem:[%s0 + $0x98] sm:$0x1f]
  %v496 = vld [vmem:[%s0 + $0xa0] sm:$0xff]
  %v497 = vld [vmem:[%s0 + $0xa8] sm:$0x1f]
  %v498 = vld [vmem:[%s0 + $0xb0] sm:$0xff]
  %v499 = vld [vmem:[%s0 + $0xb8] sm:$0x1f]
  %v500 = vld [vmem:[%s0 + $0xc0] sm:$0xff]
  %v501 = vld [vmem:[%s0 + $0xc8] sm:$0x1f]
  %v502 = vld [vmem:[%s0 + $0xd0] sm:$0xff]
  %v503 = vld [vmem:[%s0 + $0xd8] sm:$0x1f]
  %v504 = vld [vmem:[%s0 + $0xe0] sm:$0xff]
  %v505 = vld [vmem:[%s0 + $0xe8] sm:$0x1f]
  %v506 = vld [vmem:[%s0 + $0xf0] sm:$0xff]
  %v507 = vld [vmem:[%s0 + $0xf8] sm:$0x1f]
  %v508 = vld [vmem:[%s0 + $0x1] sm:$0xff]
  %v509 = vld [vmem:[%s0 + $0x9] sm:$0x1f]
  %v510 = vld [vmem:[%s0 + $0x11] sm:$0xff]
  %v511 = vld [vmem:[%s0 + $0x19] sm:$0x1f]
  %v512 = vld [vmem:[%s0 + $0x21] sm:$0xff]
  %v513 = vld [vmem:[%s0 + $0x29] sm:$0x1f]
  %v514 = vld [vmem:[%s0 + $0x31] sm:$0xff]
  %v515 = vld [vmem:[%s0 + $0x39] sm:$0x1f]
  %v516 = vld [vmem:[%s0 + $0x41] sm:$0xff]
  %v517 = vld [vmem:[%s0 + $0x49] sm:$0x1f]
  %v518 = vld [vmem:[%s0 + $0x51] sm:$0xff]
  %v519 = vld [vmem:[%s0 + $0x59] sm:$0x1f]
  %v520 = vld [vmem:[%s0 + $0x61] sm:$0xff]
  %v521 = vld [vmem:[%s0 + $0x69] sm:$0x1f]
  %v522 = vld [vmem:[%s0 + $0x71] sm:$0xff]
  %v523 = vld [vmem:[%s0 + $0x79] sm:$0x1f]
  %v524 = vld [vmem:[%s0 + $0x81] sm:$0xff]
  %v525 = vld [vmem:[%s0 + $0x89] sm:$0x1f]
  %v526 = vld [vmem:[%s0 + $0x91] sm:$0xff]
  %v527 = vld [vmem:[%s0 + $0x99] sm:$0x1f]
  %v528 = vld [vmem:[%s0 + $0xa1] sm:$0xff]
  %v529 = vld [vmem:[%s0 + $0xa9] sm:$0x1f]
  %v530 = vld [vmem:[%s0 + $0xb1] sm:$0xff]
  %v531 = vld [vmem:[%s0 + $0xb9] sm:$0x1f]
  %v532 = vld [vmem:[%s0 + $0xc1] sm:$0xff]
  %v533 = vld [vmem:[%s0 + $0xc9] sm:$0x1f]
  %v534 = vld [vmem:[%s0 + $0xd1] sm:$0xff]
  %v535 = vld [vmem:[%s0 + $0xd9] sm:$0x1f]
  %v536 = vld [vmem:[%s0 + $0xe1] sm:$0xff]
  %v537 = vld [vmem:[%s0 + $0xe9] sm:$0x1f]
  %v538 = vld [vmem:[%s0 + $0xf1] sm:$0xff]
  %v539 = vld [vmem:[%s0 + $0xf9] sm:$0x1f]
  %v540 = vadd.f32 %v476, %v508
  %v541 = vadd.f32 %v477, %v509
  %v542 = vadd.f32 %v478, %v510
  %v543 = vadd.f32 %v479, %v511
  %v544 = vadd.f32 %v480, %v512
  %v545 = vadd.f32 %v481, %v513
  %v546 = vadd.f32 %v482, %v514
  %v547 = vadd.f32 %v483, %v515
  %v548 = vadd.f32 %v484, %v516
  %v549 = vadd.f32 %v485, %v517
  %v550 = vadd.f32 %v486, %v518
  %v551 = vadd.f32 %v487, %v519
  %v552 = vadd.f32 %v488, %v520
  %v553 = vadd.f32 %v489, %v521
  %v554 = vadd.f32 %v490, %v522
  %v555 = vadd.f32 %v491, %v523
  %v556 = vadd.f32 %v492, %v524
  %v557 = vadd.f32 %v493, %v525
  %v558 = vadd.f32 %v494, %v526
  %v559 = vadd.f32 %v495, %v527
  %v560 = vadd.f32 %v496, %v528
  %v561 = vadd.f32 %v497, %v529
  %v562 = vadd.f32 %v498, %v530
  %v563 = vadd.f32 %v499, %v531
  %v564 = vadd.f32 %v500, %v532
  %v565 = vadd.f32 %v501, %v533
  %v566 = vadd.f32 %v502, %v534
  %v567 = vadd.f32 %v503, %v535
  %v568 = vadd.f32 %v504, %v536
  %v569 = vadd.f32 %v505, %v537
  %v570 = vadd.f32 %v506, %v538
  %v571 = vadd.f32 %v507, %v539
  %v572 = vld [vmem:[%s0 + $0x2] sm:$0xff]
  %v573 = vld [vmem:[%s0 + $0xa] sm:$0x1f]
  %v574 = vld [vmem:[%s0 + $0x12] sm:$0xff]
  %v575 = vld [vmem:[%s0 + $0x1a] sm:$0x1f]
  %v576 = vld [vmem:[%s0 + $0x22] sm:$0xff]
  %v577 = vld [vmem:[%s0 + $0x2a] sm:$0x1f]
  %v578 = vld [vmem:[%s0 + $0x32] sm:$0xff]
  %v579 = vld [vmem:[%s0 + $0x3a] sm:$0x1f]
  %v580 = vld [vmem:[%s0 + $0x42] sm:$0xff]
  %v581 = vld [vmem:[%s0 + $0x4a] sm:$0x1f]
  %v582 = vld [vmem:[%s0 + $0x52] sm:$0xff]
  %v583 = vld [vmem:[%s0 + $0x5a] sm:$0x1f]
  %v584 = vld [vmem:[%s0 + $0x62] sm:$0xff]
  %v585 = vld [vmem:[%s0 + $0x6a] sm:$0x1f]
  %v586 = vld [vmem:[%s0 + $0x72] sm:$0xff]
  %v587 = vld [vmem:[%s0 + $0x7a] sm:$0x1f]
  %v588 = vld [vmem:[%s0 + $0x82] sm:$0xff]
  %v589 = vld [vmem:[%s0 + $0x8a] sm:$0x1f]
  %v590 = vld [vmem:[%s0 + $0x92] sm:$0xff]
  %v591 = vld [vmem:[%s0 + $0x9a] sm:$0x1f]
  %v592 = vld [vmem:[%s0 + $0xa2] sm:$0xff]
  %v593 = vld [vmem:[%s0 + $0xaa] sm:$0x1f]
  %v594 = vld [vmem:[%s0 + $0xb2] sm:$0xff]
  %v595 = vld [vmem:[%s0 + $0xba] sm:$0x1f]
  %v596 = vld [vmem:[%s0 + $0xc2] sm:$0xff]
  %v597 = vld [vmem:[%s0 + $0xca] sm:$0x1f]
  %v598 = vld [vmem:[%s0 + $0xd2] sm:$0xff]
  %v599 = vld [vmem:[%s0 + $0xda] sm:$0x1f]
  %v600 = vld [vmem:[%s0 + $0xe2] sm:$0xff]
  %v601 = vld [vmem:[%s0 + $0xea] sm:$0x1f]
  %v602 = vld [vmem:[%s0 + $0xf2] sm:$0xff]
  %v603 = vld [vmem:[%s0 + $0xfa] sm:$0x1f]
  %v604 = vld [vmem:[%s0 + $0x3] sm:$0xff]
  %v605 = vld [vmem:[%s0 + $0xb] sm:$0x1f]
  %v606 = vld [vmem:[%s0 + $0x13] sm:$0xff]
  %v607 = vld [vmem:[%s0 + $0x1b] sm:$0x1f]
  %v608 = vld [vmem:[%s0 + $0x23] sm:$0xff]
  %v609 = vld [vmem:[%s0 + $0x2b] sm:$0x1f]
  %v610 = vld [vmem:[%s0 + $0x33] sm:$0xff]
  %v611 = vld [vmem:[%s0 + $0x3b] sm:$0x1f]
  %v612 = vld [vmem:[%s0 + $0x43] sm:$0xff]
  %v613 = vld [vmem:[%s0 + $0x4b] sm:$0x1f]
  %v614 = vld [vmem:[%s0 + $0x53] sm:$0xff]
  %v615 = vld [vmem:[%s0 + $0x5b] sm:$0x1f]
  %v616 = vld [vmem:[%s0 + $0x63] sm:$0xff]
  %v617 = vld [vmem:[%s0 + $0x6b] sm:$0x1f]
  %v618 = vld [vmem:[%s0 + $0x73] sm:$0xff]
  %v619 = vld [vmem:[%s0 + $0x7b] sm:$0x1f]
  %v620 = vld [vmem:[%s0 + $0x83] sm:$0xff]
  %v621 = vld [vmem:[%s0 + $0x8b] sm:$0x1f]
  %v622 = vld [vmem:[%s0 + $0x93] sm:$0xff]
  %v623 = vld [vmem:[%s0 + $0x9b] sm:$0x1f]
  %v624 = vld [vmem:[%s0 + $0xa3] sm:$0xff]
  %v625 = vld [vmem:[%s0 + $0xab] sm:$0x1f]
  %v626 = vld [vmem:[%s0 + $0xb3] sm:$0xff]
  %v627 = vld [vmem:[%s0 + $0xbb] sm:$0x1f]
  %v628 = vld [vmem:[%s0 + $0xc3] sm:$0xff]
  %v629 = vld [vmem:[%s0 + $0xcb] sm:$0x1f]
  %v630 = vld [vmem:[%s0 + $0xd3] sm:$0xff]
  %v631 = vld [vmem:[%s0 + $0xdb] sm:$0x1f]
  %v632 = vld [vmem:[%s0 + $0xe3] sm:$0xff]
  %v633 = vld [vmem:[%s0 + $0xeb] sm:$0x1f]
  %v634 = vld [vmem:[%s0 + $0xf3] sm:$0xff]
  %v635 = vld [vmem:[%s0 + $0xfb] sm:$0x1f]
  %v636 = vadd.f32 %v572, %v604
  %v637 = vadd.f32 %v573, %v605
  %v638 = vadd.f32 %v574, %v606
  %v639 = vadd.f32 %v575, %v607
  %v640 = vadd.f32 %v576, %v608
  %v641 = vadd.f32 %v577, %v609
  %v642 = vadd.f32 %v578, %v610
  %v643 = vadd.f32 %v579, %v611
  %v644 = vadd.f32 %v580, %v612
  %v645 = vadd.f32 %v581, %v613
  %v646 = vadd.f32 %v582, %v614
  %v647 = vadd.f32 %v583, %v615
  %v648 = vadd.f32 %v584, %v616
  %v649 = vadd.f32 %v585, %v617
  %v650 = vadd.f32 %v586, %v618
  %v651 = vadd.f32 %v587, %v619
  %v652 = vadd.f32 %v588, %v620
  %v653 = vadd.f32 %v589, %v621
  %v654 = vadd.f32 %v590, %v622
  %v655 = vadd.f32 %v591, %v623
  %v656 = vadd.f32 %v592, %v624
  %v657 = vadd.f32 %v593, %v625
  %v658 = vadd.f32 %v594, %v626
  %v659 = vadd.f32 %v595, %v627
  %v660 = vadd.f32 %v596, %v628
  %v661 = vadd.f32 %v597, %v629
  %v662 = vadd.f32 %v598, %v630
  %v663 = vadd.f32 %v599, %v631
  %v664 = vadd.f32 %v600, %v632
  %v665 = vadd.f32 %v601, %v633
  %v666 = vadd.f32 %v602, %v634
  %v667 = vadd.f32 %v603, %v635
  %v668 = vadd.f32 %v540, %v636
  %v669 = vadd.f32 %v541, %v637
  %v670 = vadd.f32 %v542, %v638
  %v671 = vadd.f32 %v543, %v639
  %v672 = vadd.f32 %v544, %v640
  %v673 = vadd.f32 %v545, %v641
  %v674 = vadd.f32 %v546, %v642
  %v675 = vadd.f32 %v547, %v643
  %v676 = vadd.f32 %v548, %v644
  %v677 = vadd.f32 %v549, %v645
  %v678 = vadd.f32 %v550, %v646
  %v679 = vadd.f32 %v551, %v647
  %v680 = vadd.f32 %v552, %v648
  %v681 = vadd.f32 %v553, %v649
  %v682 = vadd.f32 %v554, %v650
  %v683 = vadd.f32 %v555, %v651
  %v684 = vadd.f32 %v556, %v652
  %v685 = vadd.f32 %v557, %v653
  %v686 = vadd.f32 %v558, %v654
  %v687 = vadd.f32 %v559, %v655
  %v688 = vadd.f32 %v560, %v656
  %v689 = vadd.f32 %v561, %v657
  %v690 = vadd.f32 %v562, %v658
  %v691 = vadd.f32 %v563, %v659
  %v692 = vadd.f32 %v564, %v660
  %v693 = vadd.f32 %v565, %v661
  %v694 = vadd.f32 %v566, %v662
  %v695 = vadd.f32 %v567, %v663
  %v696 = vadd.f32 %v568, %v664
  %v697 = vadd.f32 %v569, %v665
  %v698 = vadd.f32 %v570, %v666
  %v699 = vadd.f32 %v571, %v667
  %v700 = vadd.f32 %v672, %v674
  %v701 = vadd.f32 %v673, %v675
  %v702 = vadd.f32 %v674, %v676
  %v703 = vadd.f32 %v675, %v677
  %v704 = vadd.f32 %v676, %v678
  %v705 = vadd.f32 %v677, %v679
  %v706 = vadd.f32 %v678, %v680
  %v707 = vadd.f32 %v679, %v681
  %v708 = vadd.f32 %v680, %v682
  %v709 = vadd.f32 %v681, %v683
  %v710 = vadd.f32 %v682, %v684
  %v711 = vadd.f32 %v683, %v685
  %v712 = vadd.f32 %v684, %v686
  %v713 = vadd.f32 %v685, %v687
  %v714 = vadd.f32 %v686, %v688
  %v715 = vadd.f32 %v687, %v689
  %v716 = vadd.f32 %v688, %v690
  %v717 = vadd.f32 %v689, %v691
  %v718 = vadd.f32 %v690, %v692
  %v719 = vadd.f32 %v691, %v693
  %v720 = vadd.f32 %v692, %v694
  %v721 = vadd.f32 %v693, %v695
  %v722 = vadd.f32 %v694, %v696
  %v723 = vadd.f32 %v695, %v697
  %v724 = vadd.f32 %v696, %v698
  %v725 = vadd.f32 %v697, %v699
  %v726 = vadd.f32 %v668, %v670
  %v727 = vadd.f32 %v669, %v671
  %v728 = vadd.f32 %v670, %v672
  %v729 = vadd.f32 %v671, %v673
  %v730 = vsub.f32 %v700, %v726
  %v731 = vsub.f32 %v701, %v727
  %v732 = vsub.f32 %v702, %v728
  %v733 = vsub.f32 %v703, %v729
  %v734 = vsub.f32 %v704, %v700
  %v735 = vsub.f32 %v705, %v701
  %v736 = vsub.f32 %v706, %v702
  %v737 = vsub.f32 %v707, %v703
  %v738 = vsub.f32 %v708, %v704
  %v739 = vsub.f32 %v709, %v705
  %v740 = vsub.f32 %v710, %v706
  %v741 = vsub.f32 %v711, %v707
  %v742 = vsub.f32 %v712, %v708
  %v743 = vsub.f32 %v713, %v709
  %v744 = vsub.f32 %v714, %v710
  %v745 = vsub.f32 %v715, %v711
  %v746 = vsub.f32 %v716, %v712
  %v747 = vsub.f32 %v717, %v713
  %v748 = vsub.f32 %v718, %v714
  %v749 = vsub.f32 %v719, %v715
  %v750 = vsub.f32 %v720, %v716
  %v751 = vsub.f32 %v721, %v717
  %v752 = vsub.f32 %v722, %v718
  %v753 = vsub.f32 %v723, %v719
  %v754 = vsub.f32 %v724, %v720
  %v755 = vsub.f32 %v725, %v721
  %s756 = scalar_lea.vmem %s1, 416
  %757 = vst.msk [vmem:[%s756] sm:$0xff] %vm290, %v730
  %758 = vst.msk [vmem:[%s756 + $0x8] sm:$0x1f] %vm292, %v731
  %759 = vst.msk [vmem:[%s756 + $0x10] sm:$0xff] %vm290, %v732
  %760 = vst.msk [vmem:[%s756 + $0x18] sm:$0x1f] %vm292, %v733
  %761 = vst.msk [vmem:[%s756 + $0x20] sm:$0xff] %vm290, %v734
  %762 = vst.msk [vmem:[%s756 + $0x28] sm:$0x1f] %vm292, %v735
  %763 = vst.msk [vmem:[%s756 + $0x30] sm:$0xff] %vm290, %v736
  %764 = vst.msk [vmem:[%s756 + $0x38] sm:$0x1f] %vm292, %v737
  %765 = vst.msk [vmem:[%s756 + $0x40] sm:$0xff] %vm290, %v738
  %766 = vst.msk [vmem:[%s756 + $0x48] sm:$0x1f] %vm292, %v739
  %767 = vst.msk [vmem:[%s756 + $0x50] sm:$0xff] %vm290, %v740
  %768 = vst.msk [vmem:[%s756 + $0x58] sm:$0x1f] %vm292, %v741
  %769 = vst.msk [vmem:[%s756 + $0x60] sm:$0xff] %vm290, %v742
  %770 = vst.msk [vmem:[%s756 + $0x68] sm:$0x1f] %vm292, %v743
  %771 = vst.msk [vmem:[%s756 + $0x70] sm:$0xff] %vm290, %v744
  %772 = vst.msk [vmem:[%s756 + $0x78] sm:$0x1f] %vm292, %v745
  %773 = vst.msk [vmem:[%s756 + $0x80] sm:$0xff] %vm290, %v746
  %774 = vst.msk [vmem:[%s756 + $0x88] sm:$0x1f] %vm292, %v747
  %775 = vst.msk [vmem:[%s756 + $0x90] sm:$0xff] %vm290, %v748
  %776 = vst.msk [vmem:[%s756 + $0x98] sm:$0x1f] %vm292, %v749
  %777 = vst.msk [vmem:[%s756 + $0xa0] sm:$0xff] %vm290, %v750
  %778 = vst.msk [vmem:[%s756 + $0xa8] sm:$0x1f] %vm292, %v751
  %779 = vst.msk [vmem:[%s756 + $0xb0] sm:$0xff] %vm290, %v752
  %780 = vst.msk [vmem:[%s756 + $0xb8] sm:$0x1f] %vm292, %v753
  %781 = vst.msk [vmem:[%s756 + $0xc0] sm:$0xff] %vm290, %v754
  %782 = vst.msk [vmem:[%s756 + $0xc8] sm:$0x1f] %vm292, %v755
  %v783 = vmax.f32 %v730, 0.0
  %v784 = vmax.f32 %v731, 0.0
  %v785 = vmax.f32 %v732, 0.0
  %v786 = vmax.f32 %v733, 0.0
  %v787 = vmax.f32 %v734, 0.0
  %v788 = vmax.f32 %v735, 0.0
  %v789 = vmax.f32 %v736, 0.0
  %v790 = vmax.f32 %v737, 0.0
  %v791 = vmax.f32 %v738, 0.0
  %v792 = vmax.f32 %v739, 0.0
  %v793 = vmax.f32 %v740, 0.0
  %v794 = vmax.f32 %v741, 0.0
  %v795 = vmax.f32 %v742, 0.0
  %v796 = vmax.f32 %v743, 0.0
  %v797 = vmax.f32 %v744, 0.0
  %v798 = vmax.f32 %v745, 0.0
  %v799 = vmax.f32 %v746, 0.0
  %v800 = vmax.f32 %v747, 0.0
  %v801 = vmax.f32 %v748, 0.0
  %v802 = vmax.f32 %v749, 0.0
  %v803 = vmax.f32 %v750, 0.0
  %v804 = vmax.f32 %v751, 0.0
  %v805 = vmax.f32 %v752, 0.0
  %v806 = vmax.f32 %v753, 0.0
  %v807 = vmax.f32 %v754, 0.0
  %v808 = vmax.f32 %v755, 0.0
  %s809 = scalar_lea.vmem %s2, 416
  %810 = vst.msk [vmem:[%s809] sm:$0xff] %vm290, %v783
  %811 = vst.msk [vmem:[%s809 + $0x8] sm:$0x1f] %vm292, %v784
  %812 = vst.msk [vmem:[%s809 + $0x10] sm:$0xff] %vm290, %v785
  %813 = vst.msk [vmem:[%s809 + $0x18] sm:$0x1f] %vm292, %v786
  %814 = vst.msk [vmem:[%s809 + $0x20] sm:$0xff] %vm290, %v787
  %815 = vst.msk [vmem:[%s809 + $0x28] sm:$0x1f] %vm292, %v788
  %816 = vst.msk [vmem:[%s809 + $0x30] sm:$0xff] %vm290, %v789
  %817 = vst.msk [vmem:[%s809 + $0x38] sm:$0x1f] %vm292, %v790
  %818 = vst.msk [vmem:[%s809 + $0x40] sm:$0xff] %vm290, %v791
  %819 = vst.msk [vmem:[%s809 + $0x48] sm:$0x1f] %vm292, %v792
  %820 = vst.msk [vmem:[%s809 + $0x50] sm:$0xff] %vm290, %v793
  %821 = vst.msk [vmem:[%s809 + $0x58] sm:$0x1f] %vm292, %v794
  %822 = vst.msk [vmem:[%s809 + $0x60] sm:$0xff] %vm290, %v795
  %823 = vst.msk [vmem:[%s809 + $0x68] sm:$0x1f] %vm292, %v796
  %824 = vst.msk [vmem:[%s809 + $0x70] sm:$0xff] %vm290, %v797
  %825 = vst.msk [vmem:[%s809 + $0x78] sm:$0x1f] %vm292, %v798
  %826 = vst.msk [vmem:[%s809 + $0x80] sm:$0xff] %vm290, %v799
  %827 = vst.msk [vmem:[%s809 + $0x88] sm:$0x1f] %vm292, %v800
  %828 = vst.msk [vmem:[%s809 + $0x90] sm:$0xff] %vm290, %v801
  %829 = vst.msk [vmem:[%s809 + $0x98] sm:$0x1f] %vm292, %v802
  %830 = vst.msk [vmem:[%s809 + $0xa0] sm:$0xff] %vm290, %v803
  %831 = vst.msk [vmem:[%s809 + $0xa8] sm:$0x1f] %vm292, %v804
  %832 = vst.msk [vmem:[%s809 + $0xb0] sm:$0xff] %vm290, %v805
  %833 = vst.msk [vmem:[%s809 + $0xb8] sm:$0x1f] %vm292, %v806
  %834 = vst.msk [vmem:[%s809 + $0xc0] sm:$0xff] %vm290, %v807
  %835 = vst.msk [vmem:[%s809 + $0xc8] sm:$0x1f] %vm292, %v808
  %v836 = vsub.f32 0.0, %v730
  %v837 = vsub.f32 0.0, %v731
  %v838 = vsub.f32 0.0, %v732
  %v839 = vsub.f32 0.0, %v733
  %v840 = vsub.f32 0.0, %v734
  %v841 = vsub.f32 0.0, %v735
  %v842 = vsub.f32 0.0, %v736
  %v843 = vsub.f32 0.0, %v737
  %v844 = vsub.f32 0.0, %v738
  %v845 = vsub.f32 0.0, %v739
  %v846 = vsub.f32 0.0, %v740
  %v847 = vsub.f32 0.0, %v741
  %v848 = vsub.f32 0.0, %v742
  %v849 = vsub.f32 0.0, %v743
  %v850 = vsub.f32 0.0, %v744
  %v851 = vsub.f32 0.0, %v745
  %v852 = vsub.f32 0.0, %v746
  %v853 = vsub.f32 0.0, %v747
  %v854 = vsub.f32 0.0, %v748
  %v855 = vsub.f32 0.0, %v749
  %v856 = vsub.f32 0.0, %v750
  %v857 = vsub.f32 0.0, %v751
  %v858 = vsub.f32 0.0, %v752
  %v859 = vsub.f32 0.0, %v753
  %v860 = vsub.f32 0.0, %v754
  %v861 = vsub.f32 0.0, %v755
  %s862 = scalar_lea.vmem %s1, 624
  %863 = vst.msk [vmem:[%s862] sm:$0xff] %vm290, %v836
  %864 = vst.msk [vmem:[%s862 + $0x8] sm:$0x1f] %vm292, %v837
  %865 = vst.msk [vmem:[%s862 + $0x10] sm:$0xff] %vm290, %v838
  %866 = vst.msk [vmem:[%s862 + $0x18] sm:$0x1f] %vm292, %v839
  %867 = vst.msk [vmem:[%s862 + $0x20] sm:$0xff] %vm290, %v840
  %868 = vst.msk [vmem:[%s862 + $0x28] sm:$0x1f] %vm292, %v841
  %869 = vst.msk [vmem:[%s862 + $0x30] sm:$0xff] %vm290, %v842
  %870 = vst.msk [vmem:[%s862 + $0x38] sm:$0x1f] %vm292, %v843
  %871 = vst.msk [vmem:[%s862 + $0x40] sm:$0xff] %vm290, %v844
  %872 = vst.msk [vmem:[%s862 + $0x48] sm:$0x1f] %vm292, %v845
  %873 = vst.msk [vmem:[%s862 + $0x50] sm:$0xff] %vm290, %v846
  %874 = vst.msk [vmem:[%s862 + $0x58] sm:$0x1f] %vm292, %v847
  %875 = vst.msk [vmem:[%s862 + $0x60] sm:$0xff] %vm290, %v848
  %876 = vst.msk [vmem:[%s862 + $0x68] sm:$0x1f] %vm292, %v849
  %877 = vst.msk [vmem:[%s862 + $0x70] sm:$0xff] %vm290, %v850
  %878 = vst.msk [vmem:[%s862 + $0x78] sm:$0x1f] %vm292, %v851
  %879 = vst.msk [vmem:[%s862 + $0x80] sm:$0xff] %vm290, %v852
  %880 = vst.msk [vmem:[%s862 + $0x88] sm:$0x1f] %vm292, %v853
  %881 = vst.msk [vmem:[%s862 + $0x90] sm:$0xff] %vm290, %v854
  %882 = vst.msk [vmem:[%s862 + $0x98] sm:$0x1f] %vm292, %v855
  %883 = vst.msk [vmem:[%s862 + $0xa0] sm:$0xff] %vm290, %v856
  %884 = vst.msk [vmem:[%s862 + $0xa8] sm:$0x1f] %vm292, %v857
  %885 = vst.msk [vmem:[%s862 + $0xb0] sm:$0xff] %vm290, %v858
  %886 = vst.msk [vmem:[%s862 + $0xb8] sm:$0x1f] %vm292, %v859
  %887 = vst.msk [vmem:[%s862 + $0xc0] sm:$0xff] %vm290, %v860
  %888 = vst.msk [vmem:[%s862 + $0xc8] sm:$0x1f] %vm292, %v861
  %v889 = vmax.f32 %v836, 0.0
  %v890 = vmax.f32 %v837, 0.0
  %v891 = vmax.f32 %v838, 0.0
  %v892 = vmax.f32 %v839, 0.0
  %v893 = vmax.f32 %v840, 0.0
  %v894 = vmax.f32 %v841, 0.0
  %v895 = vmax.f32 %v842, 0.0
  %v896 = vmax.f32 %v843, 0.0
  %v897 = vmax.f32 %v844, 0.0
  %v898 = vmax.f32 %v845, 0.0
  %v899 = vmax.f32 %v846, 0.0
  %v900 = vmax.f32 %v847, 0.0
  %v901 = vmax.f32 %v848, 0.0
  %v902 = vmax.f32 %v849, 0.0
  %v903 = vmax.f32 %v850, 0.0
  %v904 = vmax.f32 %v851, 0.0
  %v905 = vmax.f32 %v852, 0.0
  %v906 = vmax.f32 %v853, 0.0
  %v907 = vmax.f32 %v854, 0.0
  %v908 = vmax.f32 %v855, 0.0
  %v909 = vmax.f32 %v856, 0.0
  %v910 = vmax.f32 %v857, 0.0
  %v911 = vmax.f32 %v858, 0.0
  %v912 = vmax.f32 %v859, 0.0
  %v913 = vmax.f32 %v860, 0.0
  %v914 = vmax.f32 %v861, 0.0
  %s915 = scalar_lea.vmem %s2, 624
  %916 = vst.msk [vmem:[%s915] sm:$0xff] %vm290, %v889
  %917 = vst.msk [vmem:[%s915 + $0x8] sm:$0x1f] %vm292, %v890
  %918 = vst.msk [vmem:[%s915 + $0x10] sm:$0xff] %vm290, %v891
  %919 = vst.msk [vmem:[%s915 + $0x18] sm:$0x1f] %vm292, %v892
  %920 = vst.msk [vmem:[%s915 + $0x20] sm:$0xff] %vm290, %v893
  %921 = vst.msk [vmem:[%s915 + $0x28] sm:$0x1f] %vm292, %v894
  %922 = vst.msk [vmem:[%s915 + $0x30] sm:$0xff] %vm290, %v895
  %923 = vst.msk [vmem:[%s915 + $0x38] sm:$0x1f] %vm292, %v896
  %924 = vst.msk [vmem:[%s915 + $0x40] sm:$0xff] %vm290, %v897
  %925 = vst.msk [vmem:[%s915 + $0x48] sm:$0x1f] %vm292, %v898
  %926 = vst.msk [vmem:[%s915 + $0x50] sm:$0xff] %vm290, %v899
  %927 = vst.msk [vmem:[%s915 + $0x58] sm:$0x1f] %vm292, %v900
  %928 = vst.msk [vmem:[%s915 + $0x60] sm:$0xff] %vm290, %v901
  %929 = vst.msk [vmem:[%s915 + $0x68] sm:$0x1f] %vm292, %v902
  %930 = vst.msk [vmem:[%s915 + $0x70] sm:$0xff] %vm290, %v903
  %931 = vst.msk [vmem:[%s915 + $0x78] sm:$0x1f] %vm292, %v904
  %932 = vst.msk [vmem:[%s915 + $0x80] sm:$0xff] %vm290, %v905
  %933 = vst.msk [vmem:[%s915 + $0x88] sm:$0x1f] %vm292, %v906
  %934 = vst.msk [vmem:[%s915 + $0x90] sm:$0xff] %vm290, %v907
  %935 = vst.msk [vmem:[%s915 + $0x98] sm:$0x1f] %vm292, %v908
  %936 = vst.msk [vmem:[%s915 + $0xa0] sm:$0xff] %vm290, %v909
  %937 = vst.msk [vmem:[%s915 + $0xa8] sm:$0x1f] %vm292, %v910
  %938 = vst.msk [vmem:[%s915 + $0xb0] sm:$0xff] %vm290, %v911
  %939 = vst.msk [vmem:[%s915 + $0xb8] sm:$0x1f] %vm292, %v912
  %940 = vst.msk [vmem:[%s915 + $0xc0] sm:$0xff] %vm290, %v913
  %941 = vst.msk [vmem:[%s915 + $0xc8] sm:$0x1f] %vm292, %v914
  // Predicated region
  $region6: #{tpu_custom_call.1} parent=0 // pred_check
    _
  $region7: #{tpu_custom_call.1} parent=0 // pred_check_branch
    %943 = sbr.rel (0) target = $region9
  $region8: #{tpu_custom_call.1} parent=0 // pred_region
    _
  $region9: #{tpu_custom_call.1} parent=0 // pred_fallthru
    _
  // Predicated region
  $region10: #{tpu_custom_call.1} parent=0 // pred_check
    _
  $region11: #{tpu_custom_call.1} parent=0 // pred_check_branch
    %945 = sbr.rel (0) target = $region13
  $region12: #{tpu_custom_call.1} parent=0 // pred_region
    _
  $region13: #{tpu_custom_call.1} parent=0 // pred_fallthru
    _
  // Predicated region
  $region14: #{tpu_custom_call.1} parent=0 // pred_check
    _
  $region15: #{tpu_custom_call.1} parent=0 // pred_check_branch
    %947 = sbr.rel (0) target = $region17
  $region16: #{tpu_custom_call.1} parent=0 // pred_region
    _
  $region17: #{tpu_custom_call.1} parent=0 // pred_fallthru
    _
  // Predicated region
  $region18: #{tpu_custom_call.1} parent=0 // pred_check
    _
  $region19: #{tpu_custom_call.1} parent=0 // pred_check_branch
    %949 = sbr.rel (0) target = $region21
  $region20: #{tpu_custom_call.1} parent=0 // pred_region
    _
  $region21: #{tpu_custom_call.1} parent=0 // pred_fallthru
    _

</llo_original>
